<compile_context>
chip_gen: v5e
topology: v5e:2x2
jax: 0.10.0
libtpu: 0.0.40
codegen_flags: <defaults>
</compile_context>

<pallas_src>
import functools

import jax
import jax.numpy as jnp
from jax.experimental import pallas as pl
from jax.experimental.pallas import tpu as pltpu


def _decomp_kernel(x_ref, res_ref, mean_ref, xpad_ref, *, L, C, kernel_size):
    pad = (kernel_size - 1) // 2
    F = L * C

    x = x_ref[...]                                        # (TB, F), native dtype

    # Edge-replicated padded row built in registers, one full-width store.
    if pad > 0:
        first = x[:, 0:C]
        last = x[:, F - C:F]
        xpad = jnp.concatenate([first] * pad + [x] + [last] * pad, axis=1)
    else:
        xpad = x
    xpad_ref[...] = xpad                                  # (TB, Fp)

    # Window sum: each shifted operand is loaded from VMEM at a static offset
    # (handled on the vld path), accumulated into a single f32 accumulator.
    acc = xpad_ref[:, pl.ds(0, F)].astype(jnp.float32)
    for s in range(1, kernel_size):
        acc = acc + xpad_ref[:, pl.ds(s * C, F)].astype(jnp.float32)

    mean = acc * (1.0 / kernel_size)
    # Re-load the un-padded centre from scratch instead of keeping `x` live
    # across the whole loop (keeps register pressure at ~2 full-width values).
    x_c = xpad_ref[:, pl.ds(pad * C, F)].astype(jnp.float32)

    mean_ref[...] = mean.astype(mean_ref.dtype)
    res_ref[...] = (x_c - mean).astype(res_ref.dtype)


def _pick_tile_b(B, F, Fp, itemsize):
    """Batch tile: as large as VMEM comfortably allows; >=2 grid steps if B>8."""
    if B <= 8:
        return B   # block equals the full batch dim (satisfies layout rules)
    # Per-row VMEM bytes: padded scratch + double-buffered input + two
    # double-buffered outputs + ~3 full-width f32 register/compiler temps.
    per_row = Fp * itemsize + 2 * F * itemsize + 4 * F * itemsize + 3 * F * 4
    tb = int((24 * 1024 * 1024) // max(per_row, 1))
    tb = max(8, min(tb, 512))
    # Keep at least 2 "parallel" grid steps so both v7x TensorCores get work.
    half = max(8, (((B + 1) // 2) // 8) * 8)
    tb = min(tb, half)
    return (tb // 8) * 8


def series_decomp(x, kernel_size):
    """Returns (res, moving_mean), both shaped like x (odd kernel_size)."""
    assert kernel_size % 2 == 1, (
        "kernel_size must be odd so the AvgPool1d output length equals L "
        "(as required by `res = x - moving_mean` in the PyTorch module)")
    B, L, C = x.shape
    pad = (kernel_size - 1) // 2
    F = L * C
    Fp = F + 2 * pad * C
    itemsize = jnp.dtype(x.dtype).itemsize

    # Contiguous reshape: no data movement in HBM; lane-dense (B, L*C) blocks.
    x_flat = x.reshape(B, F)

    TB = _pick_tile_b(B, F, Fp, itemsize)
    grid = (pl.cdiv(B, TB),)

    # VMEM budget: scratch + pipelined input + two pipelined outputs, with
    # headroom, capped below v7x's 64 MiB physical VMEM.
    needed = TB * (Fp * itemsize + 2 * F * itemsize + 4 * F * itemsize) + (2 << 20)
    vmem_limit = int(min(48 * 1024 * 1024, max(32 * 1024 * 1024, 2 * needed)))

    kernel = functools.partial(_decomp_kernel, L=L, C=C, kernel_size=kernel_size)

    res, mean = pl.pallas_call(
        kernel,
        out_shape=(
            jax.ShapeDtypeStruct((B, F), x.dtype),
            jax.ShapeDtypeStruct((B, F), x.dtype),
        ),
        grid=grid,
        in_specs=[pl.BlockSpec((TB, F), lambda b: (b, 0))],
        out_specs=(
            pl.BlockSpec((TB, F), lambda b: (b, 0)),
            pl.BlockSpec((TB, F), lambda b: (b, 0)),
        ),
        scratch_shapes=[pltpu.VMEM((TB, Fp), x.dtype)],
        compiler_params=pltpu.CompilerParams(
            dimension_semantics=("parallel",),
            vmem_limit_bytes=vmem_limit,
        ),
    )(x_flat)
    return res.reshape(B, L, C), mean.reshape(B, L, C)


def _reference(x, kernel_size):
    # Pure-JAX reference mirroring the PyTorch module.
    pad = (kernel_size - 1) // 2
    front = jnp.repeat(x[:, 0:1, :], pad, axis=1)
    end = jnp.repeat(x[:, -1:, :], pad, axis=1)
    xpad = jnp.concatenate([front, x, end], axis=1)
    L = x.shape[1]
    windows = jnp.stack([xpad[:, i:i + L, :] for i in range(kernel_size)], axis=0)
    mean = jnp.mean(windows, axis=0)
    return x - mean, mean


if __name__ == "__main__":
    key = jax.random.PRNGKey(0)
    B, L, C = 2, 8, 4
    kernel_size = 5  # odd, as used in Autoformer/DLinear (e.g. 25)

    x = jax.random.normal(key, (B, L, C), dtype=jnp.float32)

    res, mean = series_decomp(x, kernel_size)
    res = jax.block_until_ready(res)
    mean = jax.block_until_ready(mean)

    res_ref, mean_ref = _reference(x, kernel_size)
    assert jnp.allclose(res, res_ref, atol=1e-5, rtol=1e-5)
    assert jnp.allclose(mean, mean_ref, atol=1e-5, rtol=1e-5)

    print("KERNEL_OK")
</pallas_src>

<mosaic_0001>
module attributes {stable_mosaic.version = 11 : i64} {
  func.func @_decomp_kernel(%arg0: i32, %arg1: memref<2x32xf32, #tpu.memory_space<vmem>>, %arg2: memref<2x32xf32, #tpu.memory_space<vmem>>, %arg3: memref<2x32xf32, #tpu.memory_space<vmem>>, %arg4: memref<2x48xf32, #tpu.memory_space<vmem>>) attributes {dimension_semantics = [#tpu.dimension_semantics<parallel>], iteration_bounds = array<i64: 1>, scalar_prefetch = 0 : i64, scratch_operands = 1 : i64, tpu.core_type = #tpu.core_type<tc>, window_params = [{transform_indices = @transform_0, window_bounds = array<i64: 2, 32>}, {transform_indices = @transform_1, window_bounds = array<i64: 2, 32>}, {transform_indices = @transform_2, window_bounds = array<i64: 2, 32>}]} {
    %c0 = arith.constant 0 : index
    %c0_0 = arith.constant 0 : index
    %0 = vector.load %arg1[%c0, %c0_0] : memref<2x32xf32, #tpu.memory_space<vmem>>, vector<2x32xf32>
    %1 = vector.extract_strided_slice %0 {offsets = [0, 0], sizes = [2, 4], strides = [1, 1]} : vector<2x32xf32> to vector<2x4xf32>
    %2 = vector.extract_strided_slice %0 {offsets = [0, 28], sizes = [2, 4], strides = [1, 1]} : vector<2x32xf32> to vector<2x4xf32>
    %3 = tpu.concatenate %1, %1, %0, %2, %2 in 1 : vector<2x4xf32>, vector<2x4xf32>, vector<2x32xf32>, vector<2x4xf32>, vector<2x4xf32> -> vector<2x48xf32>
    %c0_1 = arith.constant 0 : index
    %c0_2 = arith.constant 0 : index
    %4 = vector.load %arg4[%c0_1, %c0_2] : memref<2x48xf32, #tpu.memory_space<vmem>>, vector<2x48xf32>
    tpu.vector_store %arg4[%c0_1, %c0_2], %3 {strides = array<i32>} : memref<2x48xf32, #tpu.memory_space<vmem>>, vector<2x48xf32>,
    %c0_3 = arith.constant 0 : index
    %c0_4 = arith.constant 0 : index
    %5 = vector.load %arg4[%c0_3, %c0_4] : memref<2x48xf32, #tpu.memory_space<vmem>>, vector<2x32xf32>
    %c0_5 = arith.constant 0 : index
    %c4 = arith.constant 4 : index
    %6 = vector.load %arg4[%c0_5, %c4] : memref<2x48xf32, #tpu.memory_space<vmem>>, vector<2x32xf32>
    %7 = arith.addf %5, %6 : vector<2x32xf32>
    %c0_6 = arith.constant 0 : index
    %c8 = arith.constant 8 : index
    %8 = vector.load %arg4[%c0_6, %c8] : memref<2x48xf32, #tpu.memory_space<vmem>>, vector<2x32xf32>
    %9 = arith.addf %7, %8 : vector<2x32xf32>
    %c0_7 = arith.constant 0 : index
    %c12 = arith.constant 12 : index
    %10 = vector.load %arg4[%c0_7, %c12] : memref<2x48xf32, #tpu.memory_space<vmem>>, vector<2x32xf32>
    %11 = arith.addf %9, %10 : vector<2x32xf32>
    %c0_8 = arith.constant 0 : index
    %c16 = arith.constant 16 : index
    %12 = vector.load %arg4[%c0_8, %c16] : memref<2x48xf32, #tpu.memory_space<vmem>>, vector<2x32xf32>
    %13 = arith.addf %11, %12 : vector<2x32xf32>
    %cst = arith.constant 2.000000e-01 : f32
    %14 = vector.broadcast %cst : f32 to vector<2x32xf32>
    %15 = arith.mulf %13, %14 : vector<2x32xf32>
    %c0_9 = arith.constant 0 : index
    %c8_10 = arith.constant 8 : index
    %16 = vector.load %arg4[%c0_9, %c8_10] : memref<2x48xf32, #tpu.memory_space<vmem>>, vector<2x32xf32>
    %c0_11 = arith.constant 0 : index
    %c0_12 = arith.constant 0 : index
    %17 = vector.load %arg3[%c0_11, %c0_12] : memref<2x32xf32, #tpu.memory_space<vmem>>, vector<2x32xf32>
    tpu.vector_store %arg3[%c0_11, %c0_12], %15 {strides = array<i32>} : memref<2x32xf32, #tpu.memory_space<vmem>>, vector<2x32xf32>,
    %18 = arith.subf %16, %15 : vector<2x32xf32>
    %c0_13 = arith.constant 0 : index
    %c0_14 = arith.constant 0 : index
    %19 = vector.load %arg2[%c0_13, %c0_14] : memref<2x32xf32, #tpu.memory_space<vmem>>, vector<2x32xf32>
    tpu.vector_store %arg2[%c0_13, %c0_14], %18 {strides = array<i32>} : memref<2x32xf32, #tpu.memory_space<vmem>>, vector<2x32xf32>,
    return
  }
  func.func @transform_0(%arg0: i32) -> (i32, i32) {
    %c0_i32 = arith.constant 0 : i32
    %c0_i32_0 = arith.constant 0 : i32
    return %arg0, %c0_i32 : i32, i32
  }
  func.func @transform_1(%arg0: i32) -> (i32, i32) {
    %c0_i32 = arith.constant 0 : i32
    %c0_i32_0 = arith.constant 0 : i32
    return %arg0, %c0_i32 : i32, i32
  }
  func.func @transform_2(%arg0: i32) -> (i32, i32) {
    %c0_i32 = arith.constant 0 : i32
    %c0_i32_0 = arith.constant 0 : i32
    return %arg0, %c0_i32 : i32, i32
  }
}

</mosaic_0001>

<llo_original>
// kernel: tpu_custom_call.1
$region0: #{tpu_custom_call.1}
  #allocation0 [shape = 'u32[]', space=smem, size = 0x4, offset = 0x4, fixed_abs, tag = 'smem constant byte address 0x4 - core index']
  #allocation1 [shape = 'u32[72,128]{1,0:T(1,128)}', space=vmem, size = 0x9000, scoped, tag = 'internal scratch']
  #allocation2 [shape = 'f32[2,48]{1,0:T(2,128)}', space=vmem, size = 0x400, scoped, tag = 'scratch operand']
  %s0 = inlined_call_operand.hbm [shape: f32[2,32], index: 0, kind: input, shape index: {}]
  %s1 = inlined_call_operand.hbm [shape: f32[2,32], index: 1, kind: output, shape index: {0}]
  %s2 = inlined_call_operand.hbm [shape: f32[2,32], index: 2, kind: output, shape index: {1}]
  %3 = xla_tuple %s1, %s2
  %s4 = sld [smem:[#allocation0]]
  $region26: #{tpu_custom_call.1} parent=0
    _
  %s6 = ssub.s32 1, %s4
  %s7 = scalar_select 0, %s6, %s4
  $region1: #{tpu_custom_call.1} parent=0
    #allocation3 [shape = 'u8[1024]{0}', space=vmem, size = 0x400, scoped, tag = 'input window, operand 0, single buffered']
    #allocation4 [shape = 's32[1]{0}', space=sflag, size = 0x4, scoped, tag = 'scoped memory for tpu_custom_call.1']
    #allocation5 [shape = 's32[1]{0}', space=sflag, size = 0x4, scoped, tag = 'scoped memory for tpu_custom_call.1']
    #allocation6 [shape = 'u8[1024]{0}', space=vmem, size = 0x400, scoped, tag = 'output window, operand 0, single buffered']
    #allocation7 [shape = 'u8[1024]{0}', space=vmem, size = 0x400, scoped, tag = 'output window, operand 1, single buffered']
    #allocation8 [shape = 's32[1]{0}', space=sflag, size = 0x4, scoped, tag = 'scoped memory for tpu_custom_call.1']
    %8 = vsyncpa [#allocation4], 0
    %9 = vsyncpa [#allocation5], 0
    %10 = vsyncpa [#allocation8], 0
    // Predicated region
    $region2: #{tpu_custom_call.1} parent=1 // pred_check
      _
    $region3: #{tpu_custom_call.1} parent=1 // pred_check_branch
      %12 = sbr.rel (0) target = $region5
    $region4: #{tpu_custom_call.1} parent=1 // pred_region
      %14 = vsyncadd [#allocation4], 0
      %s16 = sshll.u32 %s0, 4
      %s17 = int_to_ptr.hbm [resolvable:$true] %s16
      %s18 = sshll.u32 [#allocation3], 4
      %s19 = int_to_ptr.vmem [resolvable:$true] %s18
      %21 = dma.hbm_to_vmem [thread:$0]  %s17, 32, %s19, [#allocation4]
    $region5: #{tpu_custom_call.1} parent=1 // pred_fallthru
      _
    // Predicated region
    $region6: #{tpu_custom_call.1} parent=1 // pred_check
      _
    $region7: #{tpu_custom_call.1} parent=1 // pred_check_branch
      %23 = sbr.rel (0) target = $region9
    $region8: #{tpu_custom_call.1} parent=1 // pred_region
      %25 = dma.done [#allocation4], 32
    $region9: #{tpu_custom_call.1} parent=1 // pred_fallthru
      _
    %v26 = vld [vmem:[#allocation3] sm:$0x3]
    %28 = vrot.lane.b32.xlu0 %v26, 4
    %v29 = vpop.permute.xlu0 %28
    %31 = vrot.lane.b32.xlu0 %v26, 8
    %v32 = vpop.permute.xlu0 %31
    %34 = vrot.lane.b32.xlu0 %v26, 12
    %v35 = vpop.permute.xlu0 %34
    %37 = vrot.lane.b32.xlu0 %v26, 16
    %v38 = vpop.permute.xlu0 %37
    %vm40 = vcmask 31744
    %v41 = vsel %vm40, %v26, %v29
    %vm42 = vcmask 64512
    %v43 = vsel %vm42, %v41, %v32
    %vm44 = vcmask 326656
    %v45 = vsel %vm44, %v43, %v35
    %vm46 = vcmask 359424
    %v47 = vsel %vm46, %v45, %v38
    %vm48 = vcmask 386048
    %49 = vst.msk [vmem:[#allocation2] sm:$0x3] %vm48, %v47
    %v50 = vld [vmem:[#allocation2] sm:$0x3]
    %52 = vrot.lane.b32.xlu0 %v50, 124
    %v53 = vpop.permute.xlu0 %52
    %v55 = vadd.f32 %v50, %v53
    %56 = vrot.lane.b32.xlu0 %v50, 120
    %v57 = vpop.permute.xlu0 %56
    %v59 = vadd.f32 %v55, %v57
    %60 = vrot.lane.b32.xlu0 %v50, 116
    %v61 = vpop.permute.xlu0 %60
    %v63 = vadd.f32 %v59, %v61
    %64 = vrot.lane.b32.xlu0 %v50, 112
    %v65 = vpop.permute.xlu0 %64
    %v67 = vadd.f32 %v63, %v65
    %v68 = vmul.f32 %v67, 0.2
    %vm69 = vcmask 254976
    %70 = vst.msk [vmem:[#allocation7] sm:$0x3] %vm69, %v68
    %72 = vrot.lane.b32.xlu0 %v68, 8
    %v73 = vpop.permute.xlu0 %72
    %v75 = vsub.f32 %v50, %v73
    %77 = vrot.lane.b32.xlu0 %v75, 120
    %v78 = vpop.permute.xlu0 %77
    %80 = vst.msk [vmem:[#allocation6] sm:$0x3] %vm69, %v78
    // Predicated region
    $region10: #{tpu_custom_call.1} parent=1 // pred_check
      _
    $region11: #{tpu_custom_call.1} parent=1 // pred_check_branch
      %82 = sbr.rel (0) target = $region13
    $region12: #{tpu_custom_call.1} parent=1 // pred_region
      %84 = vsyncadd [#allocation5], 0
      %s86 = sshll.u32 [#allocation6], 4
      %s87 = int_to_ptr.vmem [resolvable:$true] %s86
      %s88 = sshll.u32 %s1, 4
      %s89 = int_to_ptr.hbm [resolvable:$true] %s88
      %91 = dma.vmem_to_hbm [thread:$0]  %s87, 32, %s89, [#allocation5]
    $region13: #{tpu_custom_call.1} parent=1 // pred_fallthru
      _
    // Predicated region
    $region14: #{tpu_custom_call.1} parent=1 // pred_check
      _
    $region15: #{tpu_custom_call.1} parent=1 // pred_check_branch
      %93 = sbr.rel (0) target = $region17
    $region16: #{tpu_custom_call.1} parent=1 // pred_region
      %95 = vsyncadd [#allocation8], 0
      %s97 = sshll.u32 [#allocation7], 4
      %s98 = int_to_ptr.vmem [resolvable:$true] %s97
      %s99 = sshll.u32 %s2, 4
      %s100 = int_to_ptr.hbm [resolvable:$true] %s99
      %102 = dma.vmem_to_hbm [thread:$0]  %s98, 32, %s100, [#allocation8]
    $region17: #{tpu_custom_call.1} parent=1 // pred_fallthru
      _
    // Predicated region
    $region18: #{tpu_custom_call.1} parent=1 // pred_check
      _
    $region19: #{tpu_custom_call.1} parent=1 // pred_check_branch
      %104 = sbr.rel (0) target = $region21
    $region20: #{tpu_custom_call.1} parent=1 // pred_region
      %106 = dma.done [#allocation5], 32
    $region21: #{tpu_custom_call.1} parent=1 // pred_fallthru
      _
    // Predicated region
    $region22: #{tpu_custom_call.1} parent=1 // pred_check
      _
    $region23: #{tpu_custom_call.1} parent=1 // pred_check_branch
      %108 = sbr.rel (0) target = $region25
    $region24: #{tpu_custom_call.1} parent=1 // pred_region
      %110 = dma.done [#allocation8], 32
    $region25: #{tpu_custom_call.1} parent=1 // pred_fallthru
      _
    %111 = vsyncpa [#allocation4], 1
    %112 = vsyncpa [#allocation5], 1
    %113 = vsyncpa [#allocation8], 1

</llo_original>
